<compile_context>
chip_gen: v5e
topology: v5e:2x2
jax: 0.10.0
libtpu: 0.0.40
codegen_flags: <defaults>
</compile_context>

<pallas_src>
import jax
import jax.numpy as jnp
from jax.experimental import pallas as pl
from jax.experimental.pallas import tpu as pltpu

W4_PAD = 128   # fc4 weight columns padded 2 -> 128 for a clean MXU matmul


def mlp_kernel(x_ref,
               w1_ref, b1_ref,
               w2_ref, b2_ref,
               w3_ref, b3_ref,
               w4_ref, b4_ref,
               o_ref):
    # x arrives as f32 (single DMA); cast to bf16 right before the MXU.
    x = x_ref[...].astype(jnp.bfloat16)
    # fc1 + ReLU : bf16 operands on the MXU, f32 accumulate, f32 elementwise.
    h = jnp.dot(x, w1_ref[...], preferred_element_type=jnp.float32)
    h = jnp.maximum(h + b1_ref[...], 0.0).astype(jnp.bfloat16)
    # dropout1 (p=0.5): identity at inference
    # fc2 + ReLU
    h = jnp.dot(h, w2_ref[...], preferred_element_type=jnp.float32)
    h = jnp.maximum(h + b2_ref[...], 0.0).astype(jnp.bfloat16)
    # dropout2 (p=0.25): identity at inference
    # fc3 + ReLU
    h = jnp.dot(h, w3_ref[...], preferred_element_type=jnp.float32)
    h = jnp.maximum(h + b3_ref[...], 0.0).astype(jnp.bfloat16)
    # fc4 (logits): padded-width matmul, but only the 2 real logits are stored.
    h = jnp.dot(h, w4_ref[...], preferred_element_type=jnp.float32)  # (tile, 128)
    o_ref[...] = (h[:, :2] + b4_ref[...]).astype(o_ref.dtype)        # (tile, 2)


def _cdiv(a, b):
    return -(-a // b)


def _round_up(x, m):
    return ((x + m - 1) // m) * m


def dnn_fc0001_forward(x, params, *, batch_tile=2048):
    """x: (B, F) float32.  params: dict of pre-transposed weights/biases.

    batch_tile is a sweepable upper bound on the per-step batch tile
    (1024-4096 reasonable on all generations; per-row VMEM footprint is tiny).
    The wrapper picks a tile that divides the (minimally padded) batch and
    guarantees >= 2 grid steps for large batches so both v7x TensorCores work.
    """
    B, F = x.shape

    # Number of grid steps: enough to keep tiles <= batch_tile, and >= 2 when
    # the batch is big enough to split across v7x's two TensorCores.
    n_steps = _cdiv(B, batch_tile)
    if B >= 256 and n_steps < 2:
        n_steps = 2
    # Tile rounded to 16 rows (bf16 sublane packing); padding waste < 16*n rows.
    tile = _round_up(_cdiv(B, n_steps), 16)
    Bp = tile * n_steps

    x_p = x if Bp == B else jnp.pad(x, ((0, Bp - B), (0, 0)))

    # bf16 MXU operands; biases stay f32 for the elementwise path.
    w1 = params["w1"].astype(jnp.bfloat16)
    w2 = params["w2"].astype(jnp.bfloat16)
    w3 = params["w3"].astype(jnp.bfloat16)
    b1 = params["b1"].astype(jnp.float32)
    b2 = params["b2"].astype(jnp.float32)
    b3 = params["b3"].astype(jnp.float32)
    # fc4: weights padded to 128 cols for the MXU; bias kept at true width 2.
    w4 = jnp.pad(params["w4"],
                 ((0, 0), (0, W4_PAD - params["w4"].shape[1]))).astype(jnp.bfloat16)
    b4 = params["b4"].astype(jnp.float32)                       # (1, 2)

    # Constant index_map -> weight/bias blocks stay resident across grid steps.
    full = lambda a: pl.BlockSpec(a.shape, lambda i: (0, 0))

    flops = 2 * Bp * (F * 256 + 256 * 128 + 128 * 32 + 32 * W4_PAD)
    bytes_accessed = (Bp * F * 4                                  # x (f32 in)
                      + Bp * 2 * 4                                # logits out
                      + 2 * (F * 256 + 256 * 128 + 128 * 32 + 32 * W4_PAD)   # bf16 weights
                      + 4 * (256 + 128 + 32 + 2))                 # f32 biases

    out = pl.pallas_call(
        mlp_kernel,
        out_shape=jax.ShapeDtypeStruct((Bp, 2), jnp.float32),
        grid=(n_steps,),
        in_specs=[
            pl.BlockSpec((tile, F), lambda i: (i, 0)),            # x batch tile
            full(w1), full(b1),
            full(w2), full(b2),
            full(w3), full(b3),
            full(w4), full(b4),
        ],
        out_specs=pl.BlockSpec((tile, 2), lambda i: (i, 0)),
        compiler_params=pltpu.CompilerParams(
            dimension_semantics=("parallel",),     # shards batch across TCs on v7x
            vmem_limit_bytes=32 * 1024 * 1024),    # headroom vs v5e's 16 MiB default
        cost_estimate=pl.CostEstimate(flops=flops, transcendentals=0,
                                      bytes_accessed=bytes_accessed),
    )(x_p, w1, b1, w2, b2, w3, b3, w4, b4)

    return out[:B] if Bp != B else out


def init_params(key, input_size):
    """Deterministic PyTorch-style (Kaiming-uniform-ish) init.
    Weights returned pre-transposed to (in, out)."""
    sizes = [(input_size, 256), (256, 128), (128, 32), (32, 2)]
    params = {}
    for idx, (fan_in, fan_out) in enumerate(sizes, start=1):
        key, kw, kb = jax.random.split(key, 3)
        bound = 1.0 / jnp.sqrt(jnp.float32(fan_in))
        params[f"w{idx}"] = jax.random.uniform(
            kw, (fan_in, fan_out), jnp.float32, -bound, bound)
        params[f"b{idx}"] = jax.random.uniform(
            kb, (1, fan_out), jnp.float32, -bound, bound)
    return params


def reference_forward(x, params):
    """Mirrors the kernel's bf16-operand / f32-accumulate arithmetic."""
    def bdot(a, w):
        return jnp.dot(a.astype(jnp.bfloat16), w.astype(jnp.bfloat16),
                       preferred_element_type=jnp.float32)
    h = jnp.maximum(bdot(x, params["w1"]) + params["b1"], 0.0)
    h = jnp.maximum(bdot(h, params["w2"]) + params["b2"], 0.0)
    h = jnp.maximum(bdot(h, params["w3"]) + params["b3"], 0.0)
    return bdot(h, params["w4"]) + params["b4"]


if __name__ == "__main__":
    key = jax.random.PRNGKey(0)
    input_size = 64

    k_x, k_p, k_x2 = jax.random.split(key, 3)
    params = init_params(k_p, input_size)

    # Small single-tile batch.
    batch = 16
    x = jax.random.normal(k_x, (batch, input_size), jnp.float32)
    out = jax.block_until_ready(dnn_fc0001_forward(x, params))
    ref = reference_forward(x, params)
    assert out.shape == (batch, 2)
    assert jnp.allclose(out, ref, atol=1e-2, rtol=1e-2), "mismatch vs reference (B=16)"

    # Non-divisible batch exercising padding + >=2 grid steps (v7x megacore path).
    batch2 = 300
    x2 = jax.random.normal(k_x2, (batch2, input_size), jnp.float32)
    out2 = jax.block_until_ready(dnn_fc0001_forward(x2, params))
    ref2 = reference_forward(x2, params)
    assert out2.shape == (batch2, 2)
    assert jnp.allclose(out2, ref2, atol=1e-2, rtol=1e-2), "mismatch vs reference (B=300)"

    print("KERNEL_OK")
</pallas_src>

<mosaic_0001>
module attributes {stable_mosaic.version = 11 : i64} {
  func.func @mlp_kernel(%arg0: i32, %arg1: memref<16x64xf32, #tpu.memory_space<vmem>>, %arg2: memref<64x256xbf16, #tpu.memory_space<vmem>>, %arg3: memref<1x256xf32, #tpu.memory_space<vmem>>, %arg4: memref<256x128xbf16, #tpu.memory_space<vmem>>, %arg5: memref<1x128xf32, #tpu.memory_space<vmem>>, %arg6: memref<128x32xbf16, #tpu.memory_space<vmem>>, %arg7: memref<1x32xf32, #tpu.memory_space<vmem>>, %arg8: memref<32x128xbf16, #tpu.memory_space<vmem>>, %arg9: memref<1x2xf32, #tpu.memory_space<vmem>>, %arg10: memref<16x2xf32, #tpu.memory_space<vmem>>) attributes {dimension_semantics = [#tpu.dimension_semantics<parallel>], iteration_bounds = array<i64: 1>, scalar_prefetch = 0 : i64, scratch_operands = 0 : i64, tpu.core_type = #tpu.core_type<tc>, window_params = [{transform_indices = @transform_0, window_bounds = array<i64: 16, 64>}, {pipeline_mode = #tpu.pipeline_mode<synchronous>, transform_indices = @transform_1, window_bounds = array<i64: 64, 256>}, {pipeline_mode = #tpu.pipeline_mode<synchronous>, transform_indices = @transform_2, window_bounds = array<i64: 1, 256>}, {pipeline_mode = #tpu.pipeline_mode<synchronous>, transform_indices = @transform_3, window_bounds = array<i64: 256, 128>}, {pipeline_mode = #tpu.pipeline_mode<synchronous>, transform_indices = @transform_4, window_bounds = array<i64: 1, 128>}, {pipeline_mode = #tpu.pipeline_mode<synchronous>, transform_indices = @transform_5, window_bounds = array<i64: 128, 32>}, {pipeline_mode = #tpu.pipeline_mode<synchronous>, transform_indices = @transform_6, window_bounds = array<i64: 1, 32>}, {pipeline_mode = #tpu.pipeline_mode<synchronous>, transform_indices = @transform_7, window_bounds = array<i64: 32, 128>}, {pipeline_mode = #tpu.pipeline_mode<synchronous>, transform_indices = @transform_8, window_bounds = array<i64: 1, 2>}, {transform_indices = @transform_9, window_bounds = array<i64: 16, 2>}]} {
    %c0 = arith.constant 0 : index
    %c0_0 = arith.constant 0 : index
    %0 = vector.load %arg1[%c0, %c0_0] : memref<16x64xf32, #tpu.memory_space<vmem>>, vector<16x64xf32>
    %1 = arith.truncf %0 : vector<16x64xf32> to vector<16x64xbf16>
    %c0_1 = arith.constant 0 : index
    %c0_2 = arith.constant 0 : index
    %2 = vector.load %arg2[%c0_1, %c0_2] : memref<64x256xbf16, #tpu.memory_space<vmem>>, vector<64x256xbf16>
    %cst = arith.constant dense<0.000000e+00> : vector<16x256xf32>
    %3 = tpu.matmul %1, %2, %cst {dimension_numbers = #tpu.dot_dimension_numbers<[1], [0], [0], [1], [0, 0, 1, 1], [], []>} : vector<16x64xbf16>, vector<64x256xbf16>, vector<16x256xf32> -> vector<16x256xf32>
    %c0_3 = arith.constant 0 : index
    %c0_4 = arith.constant 0 : index
    %4 = vector.load %arg3[%c0_3, %c0_4] : memref<1x256xf32, #tpu.memory_space<vmem>>, vector<1x256xf32>
    %5 = vector.broadcast %4 : vector<1x256xf32> to vector<16x256xf32>
    %6 = arith.addf %3, %5 : vector<16x256xf32>
    %cst_5 = arith.constant 0.000000e+00 : f32
    %7 = vector.broadcast %cst_5 : f32 to vector<16x256xf32>
    %8 = arith.maximumf %6, %7 : vector<16x256xf32>
    %9 = arith.truncf %8 : vector<16x256xf32> to vector<16x256xbf16>
    %c0_6 = arith.constant 0 : index
    %c0_7 = arith.constant 0 : index
    %10 = vector.load %arg4[%c0_6, %c0_7] : memref<256x128xbf16, #tpu.memory_space<vmem>>, vector<256x128xbf16>
    %cst_8 = arith.constant dense<0.000000e+00> : vector<16x128xf32>
    %11 = tpu.matmul %9, %10, %cst_8 {dimension_numbers = #tpu.dot_dimension_numbers<[1], [0], [0], [1], [0, 0, 1, 1], [], []>} : vector<16x256xbf16>, vector<256x128xbf16>, vector<16x128xf32> -> vector<16x128xf32>
    %c0_9 = arith.constant 0 : index
    %c0_10 = arith.constant 0 : index
    %12 = vector.load %arg5[%c0_9, %c0_10] : memref<1x128xf32, #tpu.memory_space<vmem>>, vector<1x128xf32>
    %13 = vector.broadcast %12 : vector<1x128xf32> to vector<16x128xf32>
    %14 = arith.addf %11, %13 : vector<16x128xf32>
    %cst_11 = arith.constant 0.000000e+00 : f32
    %15 = vector.broadcast %cst_11 : f32 to vector<16x128xf32>
    %16 = arith.maximumf %14, %15 : vector<16x128xf32>
    %17 = arith.truncf %16 : vector<16x128xf32> to vector<16x128xbf16>
    %c0_12 = arith.constant 0 : index
    %c0_13 = arith.constant 0 : index
    %18 = vector.load %arg6[%c0_12, %c0_13] : memref<128x32xbf16, #tpu.memory_space<vmem>>, vector<128x32xbf16>
    %cst_14 = arith.constant dense<0.000000e+00> : vector<16x32xf32>
    %19 = tpu.matmul %17, %18, %cst_14 {dimension_numbers = #tpu.dot_dimension_numbers<[1], [0], [0], [1], [0, 0, 1, 1], [], []>} : vector<16x128xbf16>, vector<128x32xbf16>, vector<16x32xf32> -> vector<16x32xf32>
    %c0_15 = arith.constant 0 : index
    %c0_16 = arith.constant 0 : index
    %20 = vector.load %arg7[%c0_15, %c0_16] : memref<1x32xf32, #tpu.memory_space<vmem>>, vector<1x32xf32>
    %21 = vector.broadcast %20 : vector<1x32xf32> to vector<16x32xf32>
    %22 = arith.addf %19, %21 : vector<16x32xf32>
    %cst_17 = arith.constant 0.000000e+00 : f32
    %23 = vector.broadcast %cst_17 : f32 to vector<16x32xf32>
    %24 = arith.maximumf %22, %23 : vector<16x32xf32>
    %25 = arith.truncf %24 : vector<16x32xf32> to vector<16x32xbf16>
    %c0_18 = arith.constant 0 : index
    %c0_19 = arith.constant 0 : index
    %26 = vector.load %arg8[%c0_18, %c0_19] : memref<32x128xbf16, #tpu.memory_space<vmem>>, vector<32x128xbf16>
    %cst_20 = arith.constant dense<0.000000e+00> : vector<16x128xf32>
    %27 = tpu.matmul %25, %26, %cst_20 {dimension_numbers = #tpu.dot_dimension_numbers<[1], [0], [0], [1], [0, 0, 1, 1], [], []>} : vector<16x32xbf16>, vector<32x128xbf16>, vector<16x128xf32> -> vector<16x128xf32>
    %28 = vector.extract_strided_slice %27 {offsets = [0, 0], sizes = [16, 2], strides = [1, 1]} : vector<16x128xf32> to vector<16x2xf32>
    %c0_21 = arith.constant 0 : index
    %c0_22 = arith.constant 0 : index
    %29 = vector.load %arg9[%c0_21, %c0_22] : memref<1x2xf32, #tpu.memory_space<vmem>>, vector<1x2xf32>
    %30 = vector.broadcast %29 : vector<1x2xf32> to vector<16x2xf32>
    %31 = arith.addf %28, %30 : vector<16x2xf32>
    %c0_23 = arith.constant 0 : index
    %c0_24 = arith.constant 0 : index
    %32 = vector.load %arg10[%c0_23, %c0_24] : memref<16x2xf32, #tpu.memory_space<vmem>>, vector<16x2xf32>
    tpu.vector_store %arg10[%c0_23, %c0_24], %31 {strides = array<i32>} : memref<16x2xf32, #tpu.memory_space<vmem>>, vector<16x2xf32>,
    return
  }
  func.func @transform_0(%arg0: i32) -> (i32, i32) {
    %c0_i32 = arith.constant 0 : i32
    %c0_i32_0 = arith.constant 0 : i32
    return %arg0, %c0_i32 : i32, i32
  }
  func.func @transform_1(%arg0: i32) -> (i32, i32) {
    %c0_i32 = arith.constant 0 : i32
    %c0_i32_0 = arith.constant 0 : i32
    %c0_i32_1 = arith.constant 0 : i32
    return %c0_i32, %c0_i32_0 : i32, i32
  }
  func.func @transform_2(%arg0: i32) -> (i32, i32) {
    %c0_i32 = arith.constant 0 : i32
    %c0_i32_0 = arith.constant 0 : i32
    %c0_i32_1 = arith.constant 0 : i32
    return %c0_i32, %c0_i32_0 : i32, i32
  }
  func.func @transform_3(%arg0: i32) -> (i32, i32) {
    %c0_i32 = arith.constant 0 : i32
    %c0_i32_0 = arith.constant 0 : i32
    %c0_i32_1 = arith.constant 0 : i32
    return %c0_i32, %c0_i32_0 : i32, i32
  }
  func.func @transform_4(%arg0: i32) -> (i32, i32) {
    %c0_i32 = arith.constant 0 : i32
    %c0_i32_0 = arith.constant 0 : i32
    %c0_i32_1 = arith.constant 0 : i32
    return %c0_i32, %c0_i32_0 : i32, i32
  }
  func.func @transform_5(%arg0: i32) -> (i32, i32) {
    %c0_i32 = arith.constant 0 : i32
    %c0_i32_0 = arith.constant 0 : i32
    %c0_i32_1 = arith.constant 0 : i32
    return %c0_i32, %c0_i32_0 : i32, i32
  }
  func.func @transform_6(%arg0: i32) -> (i32, i32) {
    %c0_i32 = arith.constant 0 : i32
    %c0_i32_0 = arith.constant 0 : i32
    %c0_i32_1 = arith.constant 0 : i32
    return %c0_i32, %c0_i32_0 : i32, i32
  }
  func.func @transform_7(%arg0: i32) -> (i32, i32) {
    %c0_i32 = arith.constant 0 : i32
    %c0_i32_0 = arith.constant 0 : i32
    %c0_i32_1 = arith.constant 0 : i32
    return %c0_i32, %c0_i32_0 : i32, i32
  }
  func.func @transform_8(%arg0: i32) -> (i32, i32) {
    %c0_i32 = arith.constant 0 : i32
    %c0_i32_0 = arith.constant 0 : i32
    %c0_i32_1 = arith.constant 0 : i32
    return %c0_i32, %c0_i32_0 : i32, i32
  }
  func.func @transform_9(%arg0: i32) -> (i32, i32) {
    %c0_i32 = arith.constant 0 : i32
    %c0_i32_0 = arith.constant 0 : i32
    return %arg0, %c0_i32 : i32, i32
  }
}

</mosaic_0001>

<llo_original>
// kernel: tpu_custom_call.1
$region0: #{tpu_custom_call.1}
  #allocation0 [shape = 'u32[]', space=smem, size = 0x4, offset = 0x4, fixed_abs, tag = 'smem constant byte address 0x4 - core index']
  #allocation1 [shape = 'u32[72,128]{1,0:T(1,128)}', space=vmem, size = 0x9000, scoped, tag = 'internal scratch']
  %s0 = inlined_call_operand.vmem [shape: f32[16,64], index: 0, kind: input, shape index: {}]
  %s1 = inlined_call_operand.vmem [shape: bf16[64,256], index: 1, kind: input, shape index: {}]
  %s2 = inlined_call_operand.hbm [shape: f32[1,256], index: 2, kind: input, shape index: {}]
  %s3 = inlined_call_operand.hbm [shape: bf16[256,128], index: 3, kind: input, shape index: {}]
  %s4 = inlined_call_operand.vmem [shape: f32[1,128], index: 4, kind: input, shape index: {}]
  %s5 = inlined_call_operand.vmem [shape: bf16[128,32], index: 5, kind: input, shape index: {}]
  %s6 = inlined_call_operand.vmem [shape: f32[1,32], index: 6, kind: input, shape index: {}]
  %s7 = inlined_call_operand.hbm [shape: bf16[32,128], index: 7, kind: input, shape index: {}]
  %s8 = inlined_call_operand.vmem [shape: f32[1,2], index: 8, kind: input, shape index: {}]
  %s9 = inlined_call_operand.vmem [shape: f32[16,2], index: 9, kind: output, shape index: {}]
  %s10 = sld [smem:[#allocation0]]
  $region58: #{tpu_custom_call.1} parent=0
    _
  %s12 = ssub.s32 1, %s10
  %s13 = scalar_select 0, %s12, %s10
  $region1: #{tpu_custom_call.1} parent=0
    #allocation2 [shape = 'u8[1024]{0}', space=vmem, size = 0x400, scoped, tag = 'input window, operand 2, single buffered']
    #allocation3 [shape = 's32[1]{0}', space=sflag, size = 0x4, scoped, tag = 'scoped memory for tpu_custom_call.1']
    #allocation4 [shape = 'u8[65536]{0}', space=vmem, size = 0x10000, scoped, tag = 'input window, operand 3, single buffered']
    #allocation5 [shape = 's32[1]{0}', space=sflag, size = 0x4, scoped, tag = 'scoped memory for tpu_custom_call.1']
    #allocation6 [shape = 'u8[8192]{0}', space=vmem, size = 0x2000, scoped, tag = 'input window, operand 7, single buffered']
    %14 = vsyncpa [#allocation3], 0
    %15 = vsyncpa [#allocation5], 0
    // Predicated region
    $region2: #{tpu_custom_call.1} parent=1 // pred_check
      _
    $region3: #{tpu_custom_call.1} parent=1 // pred_check_branch
      %17 = sbr.rel (0) target = $region5
    $region4: #{tpu_custom_call.1} parent=1 // pred_region
      _
    $region5: #{tpu_custom_call.1} parent=1 // pred_fallthru
      _
    // Predicated region
    $region6: #{tpu_custom_call.1} parent=1 // pred_check
      _
    $region7: #{tpu_custom_call.1} parent=1 // pred_check_branch
      %19 = sbr.rel (0) target = $region9
    $region8: #{tpu_custom_call.1} parent=1 // pred_region
      _
    $region9: #{tpu_custom_call.1} parent=1 // pred_fallthru
      _
    // Predicated region
    $region10: #{tpu_custom_call.1} parent=1 // pred_check
      _
    $region11: #{tpu_custom_call.1} parent=1 // pred_check_branch
      %21 = sbr.rel (0) target = $region13
    $region12: #{tpu_custom_call.1} parent=1 // pred_region
      %23 = vsyncadd [#allocation3], 0
      %s25 = sshll.u32 %s2, 4
      %s26 = int_to_ptr.hbm [resolvable:$true] %s25
      %s27 = sshll.u32 [#allocation2], 4
      %s28 = int_to_ptr.vmem [resolvable:$true] %s27
      %30 = dma.hbm_to_vmem [thread:$0]  %s26, 32, %s28, [#allocation3]
    $region13: #{tpu_custom_call.1} parent=1 // pred_fallthru
      _
    // Predicated region
    $region14: #{tpu_custom_call.1} parent=1 // pred_check
      _
    $region15: #{tpu_custom_call.1} parent=1 // pred_check_branch
      %32 = sbr.rel (0) target = $region17
    $region16: #{tpu_custom_call.1} parent=1 // pred_region
      %34 = vsyncadd [#allocation5], 0
      %s35 = sshll.u32 %s3, 4
      %s36 = int_to_ptr.hbm [resolvable:$true] %s35
      %s37 = sshll.u32 [#allocation4], 4
      %s38 = int_to_ptr.vmem [resolvable:$true] %s37
      %43 = dma.hbm_to_vmem [thread:$0]  %s36, 2048, %s38, [#allocation5], 64, 64, 4
    $region17: #{tpu_custom_call.1} parent=1 // pred_fallthru
      _
    // Predicated region
    $region18: #{tpu_custom_call.1} parent=1 // pred_check
      _
    $region19: #{tpu_custom_call.1} parent=1 // pred_check_branch
      %45 = sbr.rel (0) target = $region21
    $region20: #{tpu_custom_call.1} parent=1 // pred_region
      _
    $region21: #{tpu_custom_call.1} parent=1 // pred_fallthru
      _
    // Predicated region
    $region22: #{tpu_custom_call.1} parent=1 // pred_check
      _
    $region23: #{tpu_custom_call.1} parent=1 // pred_check_branch
      %47 = sbr.rel (0) target = $region25
    $region24: #{tpu_custom_call.1} parent=1 // pred_region
      _
    $region25: #{tpu_custom_call.1} parent=1 // pred_fallthru
      _
    // Predicated region
    $region26: #{tpu_custom_call.1} parent=1 // pred_check
      _
    $region27: #{tpu_custom_call.1} parent=1 // pred_check_branch
      %49 = sbr.rel (0) target = $region29
    $region28: #{tpu_custom_call.1} parent=1 // pred_region
      _
    $region29: #{tpu_custom_call.1} parent=1 // pred_fallthru
      _
    // Predicated region
    $region30: #{tpu_custom_call.1} parent=1 // pred_check
      _
    $region31: #{tpu_custom_call.1} parent=1 // pred_check_branch
      %51 = sbr.rel (0) target = $region33
    $region32: #{tpu_custom_call.1} parent=1 // pred_region
      %53 = vsyncadd [#allocation5], 0
      %s54 = sshll.u32 %s7, 4
      %s55 = int_to_ptr.hbm [resolvable:$true] %s54
      %s56 = sshll.u32 [#allocation6], 4
      %s57 = int_to_ptr.vmem [resolvable:$true] %s56
      %62 = dma.hbm_to_vmem [thread:$0]  %s55, 256, %s57, [#allocation5], 64, 64, 4
    $region33: #{tpu_custom_call.1} parent=1 // pred_fallthru
      _
    // Predicated region
    $region34: #{tpu_custom_call.1} parent=1 // pred_check
      _
    $region35: #{tpu_custom_call.1} parent=1 // pred_check_branch
      %64 = sbr.rel (0) target = $region37
    $region36: #{tpu_custom_call.1} parent=1 // pred_region
      _
    $region37: #{tpu_custom_call.1} parent=1 // pred_fallthru
      _
    // Predicated region
    $region38: #{tpu_custom_call.1} parent=1 // pred_check
      _
    $region39: #{tpu_custom_call.1} parent=1 // pred_check_branch
      %66 = sbr.rel (0) target = $region41
    $region40: #{tpu_custom_call.1} parent=1 // pred_region
      %68 = dma.done [#allocation3], 32
    $region41: #{tpu_custom_call.1} parent=1 // pred_fallthru
      _
    // Predicated region
    $region42: #{tpu_custom_call.1} parent=1 // pred_check
      _
    $region43: #{tpu_custom_call.1} parent=1 // pred_check_branch
      %70 = sbr.rel (0) target = $region45
    $region44: #{tpu_custom_call.1} parent=1 // pred_region
      %72 = dma.done [#allocation5], 2048
    $region45: #{tpu_custom_call.1} parent=1 // pred_fallthru
      _
    // Predicated region
    $region46: #{tpu_custom_call.1} parent=1 // pred_check
      _
    $region47: #{tpu_custom_call.1} parent=1 // pred_check_branch
      %74 = sbr.rel (0) target = $region49
    $region48: #{tpu_custom_call.1} parent=1 // pred_region
      %76 = dma.done [#allocation5], 256
    $region49: #{tpu_custom_call.1} parent=1 // pred_fallthru
      _
    %v78 = vld [vmem:[%s0] sm:$0xff]
    %v79 = vld [vmem:[%s0 + $0x8] sm:$0xff]
    %v80 = vpack.c.bf16 %v79, %v78
    %v81 = vld [vmem:[%s1] sm:$0xff]
    %v82 = vld [vmem:[%s1 + $0x8] sm:$0xff]
    %v83 = vld [vmem:[%s1 + $0x10] sm:$0xff]
    %v84 = vld [vmem:[%s1 + $0x18] sm:$0xff]
    %v85 = vld [vmem:[%s1 + $0x20] sm:$0xff]
    %v86 = vld [vmem:[%s1 + $0x28] sm:$0xff]
    %v87 = vld [vmem:[%s1 + $0x30] sm:$0xff]
    %v88 = vld [vmem:[%s1 + $0x38] sm:$0xff]
    %v89 = vld [vmem:[#allocation2] sm:$0x3]
    %v91 = vperm.slane %v89, 0
    %v92 = vperm.slane %v89, 1
    %v103 = vunpack.c.l.b16 %v81
    %v104 = vunpack.c.h.b16 %v81
    %v105 = vunpack.c.l.b16 %v82
    %v106 = vunpack.c.h.b16 %v82
    %v107 = vunpack.c.l.b16 %v83
    %v108 = vunpack.c.h.b16 %v83
    %v109 = vunpack.c.l.b16 %v84
    %v110 = vunpack.c.h.b16 %v84
    %v111 = vunpack.c.l.b16 %v85
    %v112 = vunpack.c.h.b16 %v85
    %v113 = vunpack.c.l.b16 %v86
    %v114 = vunpack.c.h.b16 %v86
    %v115 = vunpack.c.l.b16 %v87
    %v116 = vunpack.c.h.b16 %v87
    %v117 = vunpack.c.l.b16 %v88
    %v118 = vunpack.c.h.b16 %v88
    %v119 = vpack.c.b16 %v105, %v103
    %v120 = vpack.c.b16 %v106, %v104
    %v121 = vpack.c.b16 %v109, %v107
    %v122 = vpack.c.b16 %v110, %v108
    %v123 = vpack.c.b16 %v113, %v111
    %v124 = vpack.c.b16 %v114, %v112
    %v125 = vpack.c.b16 %v117, %v115
    %v126 = vpack.c.b16 %v118, %v116
    %vm135 = vcmask 523264
    %v137 = vsel %vm135, %v80, 0
    %139 = vmatpush.bf16.msra.mxu0 0
    %140 = vmatpush.bf16.msra.mxu0 0
    %141 = vmatpush.bf16.msra.mxu0 0
    %142 = vmatpush.bf16.msra.mxu0 0
    %143 = vmatpush.bf16.msra.mxu0 %v125
    %144 = vmatpush.bf16.msra.mxu0 %v123
    %145 = vmatpush.bf16.msra.mxu0 %v121
    %146 = vmatpush.bf16.msra.mxu0 %v119
    %147 = vmatmul.bf16.gmra.mxu0 %v137
    %v148 = vpop.f32.mrf.mxu0
    %v149 = vadd.f32 %v91, %v148
    %v150 = vpop.f32.mrf.mxu0
    %v151 = vadd.f32 %v91, %v150
    %152 = vdwg.mxu0
    %153 = vmatpush.bf16.msra.mxu0 0
    %154 = vmatpush.bf16.msra.mxu0 0
    %155 = vmatpush.bf16.msra.mxu0 0
    %156 = vmatpush.bf16.msra.mxu0 0
    %157 = vmatpush.bf16.msra.mxu0 %v126
    %158 = vmatpush.bf16.msra.mxu0 %v124
    %159 = vmatpush.bf16.msra.mxu0 %v122
    %160 = vmatpush.bf16.msra.mxu0 %v120
    %161 = vmatmul.bf16.gmra.mxu0 %v137
    %v162 = vpop.f32.mrf.mxu0
    %v163 = vadd.f32 %v92, %v162
    %v164 = vpop.f32.mrf.mxu0
    %v165 = vadd.f32 %v92, %v164
    %166 = vdwg.mxu0
    %v167 = vmax.f32 %v149, 0.0
    %v168 = vmax.f32 %v163, 0.0
    %v169 = vmax.f32 %v151, 0.0
    %v170 = vmax.f32 %v165, 0.0
    %v171 = vpack.c.bf16 %v169, %v167
    %v172 = vpack.c.bf16 %v170, %v168
    %v173 = vld [vmem:[#allocation4] sm:$0xf]
    %v174 = vld [vmem:[#allocation4 + $0x4] sm:$0xf]
    %v175 = vld [vmem:[#allocation4 + $0x8] sm:$0xf]
    %v176 = vld [vmem:[#allocation4 + $0xc] sm:$0xf]
    %v177 = vld [vmem:[#allocation4 + $0x10] sm:$0xf]
    %v178 = vld [vmem:[#allocation4 + $0x14] sm:$0xf]
    %v179 = vld [vmem:[#allocation4 + $0x18] sm:$0xf]
    %v180 = vld [vmem:[#allocation4 + $0x1c] sm:$0xf]
    %v181 = vld [vmem:[#allocation4 + $0x20] sm:$0xf]
    %v182 = vld [vmem:[#allocation4 + $0x24] sm:$0xf]
    %v183 = vld [vmem:[#allocation4 + $0x28] sm:$0xf]
    %v184 = vld [vmem:[#allocation4 + $0x2c] sm:$0xf]
    %v185 = vld [vmem:[#allocation4 + $0x30] sm:$0xf]
    %v186 = vld [vmem:[#allocation4 + $0x34] sm:$0xf]
    %v187 = vld [vmem:[#allocation4 + $0x38] sm:$0xf]
    %v188 = vld [vmem:[#allocation4 + $0x3c] sm:$0xf]
    %v189 = vld [vmem:[#allocation4 + $0x40] sm:$0xf]
    %v190 = vld [vmem:[#allocation4 + $0x44] sm:$0xf]
    %v191 = vld [vmem:[#allocation4 + $0x48] sm:$0xf]
    %v192 = vld [vmem:[#allocation4 + $0x4c] sm:$0xf]
    %v193 = vld [vmem:[#allocation4 + $0x50] sm:$0xf]
    %v194 = vld [vmem:[#allocation4 + $0x54] sm:$0xf]
    %v195 = vld [vmem:[#allocation4 + $0x58] sm:$0xf]
    %v196 = vld [vmem:[#allocation4 + $0x5c] sm:$0xf]
    %v197 = vld [vmem:[#allocation4 + $0x60] sm:$0xf]
    %v198 = vld [vmem:[#allocation4 + $0x64] sm:$0xf]
    %v199 = vld [vmem:[#allocation4 + $0x68] sm:$0xf]
    %v200 = vld [vmem:[#allocation4 + $0x6c] sm:$0xf]
    %v201 = vld [vmem:[#allocation4 + $0x70] sm:$0xf]
    %v202 = vld [vmem:[#allocation4 + $0x74] sm:$0xf]
    %v203 = vld [vmem:[#allocation4 + $0x78] sm:$0xf]
    %v204 = vld [vmem:[#allocation4 + $0x7c] sm:$0xf]
    %v205 = vld [vmem:[%s4] sm:$0x1]
    %v207 = vperm.slane %v205, 0
    %v241 = vunpack.c.l.b16 %v173
    %v242 = vunpack.c.l.b16 %v174
    %v243 = vunpack.c.l.b16 %v175
    %v244 = vunpack.c.l.b16 %v176
    %v245 = vunpack.c.l.b16 %v177
    %v246 = vunpack.c.l.b16 %v178
    %v247 = vunpack.c.l.b16 %v179
    %v248 = vunpack.c.l.b16 %v180
    %v249 = vunpack.c.l.b16 %v181
    %v250 = vunpack.c.l.b16 %v182
    %v251 = vunpack.c.l.b16 %v183
    %v252 = vunpack.c.l.b16 %v184
    %v253 = vunpack.c.l.b16 %v185
    %v254 = vunpack.c.l.b16 %v186
    %v255 = vunpack.c.l.b16 %v187
    %v256 = vunpack.c.l.b16 %v188
    %v257 = vunpack.c.l.b16 %v189
    %v258 = vunpack.c.l.b16 %v190
    %v259 = vunpack.c.l.b16 %v191
    %v260 = vunpack.c.l.b16 %v192
    %v261 = vunpack.c.l.b16 %v193
    %v262 = vunpack.c.l.b16 %v194
    %v263 = vunpack.c.l.b16 %v195
    %v264 = vunpack.c.l.b16 %v196
    %v265 = vunpack.c.l.b16 %v197
    %v266 = vunpack.c.l.b16 %v198
    %v267 = vunpack.c.l.b16 %v199
    %v268 = vunpack.c.l.b16 %v200
    %v269 = vunpack.c.l.b16 %v201
    %v270 = vunpack.c.l.b16 %v202
    %v271 = vunpack.c.l.b16 %v203
    %v272 = vunpack.c.l.b16 %v204
    %v273 = vpack.c.b16 %v242, %v241
    %v274 = vpack.c.b16 %v244, %v243
    %v275 = vpack.c.b16 %v246, %v245
    %v276 = vpack.c.b16 %v248, %v247
    %v277 = vpack.c.b16 %v250, %v249
    %v278 = vpack.c.b16 %v252, %v251
    %v279 = vpack.c.b16 %v254, %v253
    %v280 = vpack.c.b16 %v256, %v255
    %v281 = vpack.c.b16 %v258, %v257
    %v282 = vpack.c.b16 %v260, %v259
    %v283 = vpack.c.b16 %v262, %v261
    %v284 = vpack.c.b16 %v264, %v263
    %v285 = vpack.c.b16 %v266, %v265
    %v286 = vpack.c.b16 %v268, %v267
    %v287 = vpack.c.b16 %v270, %v269
    %v288 = vpack.c.b16 %v272, %v271
    %305 = vmatpush.bf16.msra.mxu0 %v280
    %306 = vmatpush.bf16.msra.mxu0 %v279
    %307 = vmatpush.bf16.msra.mxu0 %v278
    %308 = vmatpush.bf16.msra.mxu0 %v277
    %309 = vmatpush.bf16.msra.mxu0 %v276
    %310 = vmatpush.bf16.msra.mxu0 %v275
    %311 = vmatpush.bf16.msra.mxu0 %v274
    %312 = vmatpush.bf16.msra.mxu0 %v273
    %313 = vmatmul.bf16.gmra.mxu0 %v171
    %v314 = vpop.f32.mrf.mxu0
    %v315 = vadd.f32 %v207, %v314
    %v316 = vpop.f32.mrf.mxu0
    %v317 = vadd.f32 %v207, %v316
    %318 = vdwg.mxu0
    %319 = vmatpush.bf16.msra.mxu0 %v288
    %320 = vmatpush.bf16.msra.mxu0 %v287
    %321 = vmatpush.bf16.msra.mxu0 %v286
    %322 = vmatpush.bf16.msra.mxu0 %v285
    %323 = vmatpush.bf16.msra.mxu0 %v284
    %324 = vmatpush.bf16.msra.mxu0 %v283
    %325 = vmatpush.bf16.msra.mxu0 %v282
    %326 = vmatpush.bf16.msra.mxu0 %v281
    %327 = vmatmul.bf16.gmra.mxu0 %v172
    %v328 = vpop.f32.mrf.mxu0
    %v329 = vadd.f32 %v315, %v328
    %v330 = vpop.f32.mrf.mxu0
    %v331 = vadd.f32 %v317, %v330
    %332 = vdwg.mxu0
    %v333 = vmax.f32 %v329, 0.0
    %v334 = vmax.f32 %v331, 0.0
    %v335 = vpack.c.bf16 %v334, %v333
    %v336 = vld [vmem:[%s5] sm:$0xf]
    %v337 = vld [vmem:[%s5 + $0x4] sm:$0xf]
    %v338 = vld [vmem:[%s5 + $0x8] sm:$0xf]
    %v339 = vld [vmem:[%s5 + $0xc] sm:$0xf]
    %v340 = vld [vmem:[%s5 + $0x10] sm:$0xf]
    %v341 = vld [vmem:[%s5 + $0x14] sm:$0xf]
    %v342 = vld [vmem:[%s5 + $0x18] sm:$0xf]
    %v343 = vld [vmem:[%s5 + $0x1c] sm:$0xf]
    %v344 = vld [vmem:[%s5 + $0x20] sm:$0xf]
    %v345 = vld [vmem:[%s5 + $0x24] sm:$0xf]
    %v346 = vld [vmem:[%s5 + $0x28] sm:$0xf]
    %v347 = vld [vmem:[%s5 + $0x2c] sm:$0xf]
    %v348 = vld [vmem:[%s5 + $0x30] sm:$0xf]
    %v349 = vld [vmem:[%s5 + $0x34] sm:$0xf]
    %v350 = vld [vmem:[%s5 + $0x38] sm:$0xf]
    %v351 = vld [vmem:[%s5 + $0x3c] sm:$0xf]
    %v352 = vld [vmem:[%s6] sm:$0x1]
    %v354 = vperm.slane %v352, 0
    %v372 = vunpack.c.l.b16 %v336
    %v373 = vunpack.c.l.b16 %v337
    %v374 = vunpack.c.l.b16 %v338
    %v375 = vunpack.c.l.b16 %v339
    %v376 = vunpack.c.l.b16 %v340
    %v377 = vunpack.c.l.b16 %v341
    %v378 = vunpack.c.l.b16 %v342
    %v379 = vunpack.c.l.b16 %v343
    %v380 = vunpack.c.l.b16 %v344
    %v381 = vunpack.c.l.b16 %v345
    %v382 = vunpack.c.l.b16 %v346
    %v383 = vunpack.c.l.b16 %v347
    %v384 = vunpack.c.l.b16 %v348
    %v385 = vunpack.c.l.b16 %v349
    %v386 = vunpack.c.l.b16 %v350
    %v387 = vunpack.c.l.b16 %v351
    %v388 = vpack.c.b16 %v373, %v372
    %v389 = vpack.c.b16 %v375, %v374
    %v390 = vpack.c.b16 %v377, %v376
    %v391 = vpack.c.b16 %v379, %v378
    %v392 = vpack.c.b16 %v381, %v380
    %v393 = vpack.c.b16 %v383, %v382
    %v394 = vpack.c.b16 %v385, %v384
    %v395 = vpack.c.b16 %v387, %v386
    %404 = vmatpush.bf16.msra.mxu0 %v395
    %405 = vmatpush.bf16.msra.mxu0 %v394
    %406 = vmatpush.bf16.msra.mxu0 %v393
    %407 = vmatpush.bf16.msra.mxu0 %v392
    %408 = vmatpush.bf16.msra.mxu0 %v391
    %409 = vmatpush.bf16.msra.mxu0 %v390
    %410 = vmatpush.bf16.msra.mxu0 %v389
    %411 = vmatpush.bf16.msra.mxu0 %v388
    %412 = vmatmul.bf16.gmra.mxu0 %v335
    %v413 = vpop.f32.mrf.mxu0
    %v414 = vadd.f32 %v354, %v413
    %v415 = vpop.f32.mrf.mxu0
    %v416 = vadd.f32 %v354, %v415
    %417 = vdwg.mxu0
    %v418 = vmax.f32 %v414, 0.0
    %v419 = vmax.f32 %v416, 0.0
    %v420 = vpack.c.bf16 %v419, %v418
    %v421 = vld [vmem:[#allocation6] sm:$0xf]
    %v422 = vld [vmem:[#allocation6 + $0x4] sm:$0xf]
    %v423 = vld [vmem:[#allocation6 + $0x8] sm:$0xf]
    %v424 = vld [vmem:[#allocation6 + $0xc] sm:$0xf]
    %v429 = vunpack.c.l.b16 %v421
    %v430 = vunpack.c.l.b16 %v422
    %v431 = vunpack.c.l.b16 %v423
    %v432 = vunpack.c.l.b16 %v424
    %v433 = vpack.c.b16 %v430, %v429
    %v434 = vpack.c.b16 %v432, %v431
    %vm437 = vcmask 261120
    %v439 = vsel %vm437, %v420, 0
    %441 = vmatpush.bf16.msra.mxu0 0
    %442 = vmatpush.bf16.msra.mxu0 0
    %443 = vmatpush.bf16.msra.mxu0 0
    %444 = vmatpush.bf16.msra.mxu0 0
    %445 = vmatpush.bf16.msra.mxu0 0
    %446 = vmatpush.bf16.msra.mxu0 0
    %447 = vmatpush.bf16.msra.mxu0 %v434
    %448 = vmatpush.bf16.msra.mxu0 %v433
    %449 = vmatmul.bf16.gmra.mxu0 %v439
    %v450 = vpop.f32.mrf.mxu0
    %v451 = vadd.f32 0.0, %v450
    %v452 = vpop.f32.mrf.mxu0
    %v453 = vadd.f32 0.0, %v452
    %454 = vdwg.mxu0
    %v455 = vld [vmem:[%s8] sm:$0x1]
    %v457 = vperm.slane %v455, 0
    %v459 = vadd.f32 %v451, %v457
    %v460 = vadd.f32 %v453, %v457
    %vm461 = vcmask 15360
    %462 = vst.msk [vmem:[%s9] sm:$0xff] %vm461, %v459
    %463 = vst.msk [vmem:[%s9 + $0x8] sm:$0xff] %vm461, %v460
    // Predicated region
    $region50: #{tpu_custom_call.1} parent=1 // pred_check
      _
    $region51: #{tpu_custom_call.1} parent=1 // pred_check_branch
      %465 = sbr.rel (0) target = $region53
    $region52: #{tpu_custom_call.1} parent=1 // pred_region
      _
    $region53: #{tpu_custom_call.1} parent=1 // pred_fallthru
      _
    // Predicated region
    $region54: #{tpu_custom_call.1} parent=1 // pred_check
      _
    $region55: #{tpu_custom_call.1} parent=1 // pred_check_branch
      %467 = sbr.rel (0) target = $region57
    $region56: #{tpu_custom_call.1} parent=1 // pred_region
      _
    $region57: #{tpu_custom_call.1} parent=1 // pred_fallthru
      _
    %468 = vsyncpa [#allocation3], 1
    %469 = vsyncpa [#allocation5], 1

</llo_original>
